<compile_context>
chip_gen: v5e
topology: v5e:2x2
jax: 0.10.0
libtpu: 0.0.40
codegen_flags: <defaults>
</compile_context>

<pallas_src>
import jax
import jax.numpy as jnp
from jax.experimental import pallas as pl
from jax.experimental.pallas import tpu as pltpu


def _round_up(n, m):
    return ((n + m - 1) // m) * m


def _mlp_kernel(x_ref, w1_ref, b1_ref, w2_ref, b2_ref, o_ref):
    # Layer 1 (input_size -> H) on the MXU: bf16 inputs, f32 accumulate.
    h = jnp.dot(x_ref[...], w1_ref[...], preferred_element_type=jnp.float32)
    h = jnp.maximum(h + b1_ref[...], 0.0)
    # Layer 2 (H -> 1): an N=1 matmul would waste the MXU, so run it on the
    # VPU as an elementwise multiply + lane reduction.  b2 is an SMEM scalar.
    logits = jnp.sum(h * w2_ref[...], axis=-1, keepdims=True) + b2_ref[0, 0]
    o_ref[...] = jax.nn.sigmoid(logits).astype(o_ref.dtype)


def meta_mortality_forward(x, w1, b1, w2, b2, *, tile_b=1024):
    """x: (B, input_size) f32; w1: (input_size, H); b1: (1, H) or (H,);
       w2: (H, 1) or (H,); b2: (1, 1) or scalar  ->  (B, 1) f32."""
    assert tile_b % 8 == 0, "tile_b must be a multiple of 8 (sublane count)"
    B, in_features = x.shape
    H = w1.shape[1]

    # Pick the batch tile: large tiles amortize the ~0.35us/step overhead; for
    # tiny B just use one (8-aligned) tile.
    tile = min(tile_b, _round_up(B, 8))
    b_padded = _round_up(B, tile)
    if b_padded != B:
        x = jnp.pad(x, ((0, b_padded - B), (0, 0)))

    # bf16 streaming for the dominant HBM traffic; everything else stays f32.
    x_bf = x.astype(jnp.bfloat16)
    w1_bf = w1.astype(jnp.bfloat16)
    b1_row = jnp.asarray(b1, jnp.float32).reshape(1, H)
    w2_row = jnp.asarray(w2, jnp.float32).reshape(1, H)   # second layer as a row
    b2_s = jnp.asarray(b2, jnp.float32).reshape(1, 1)

    grid = (b_padded // tile,)
    out = pl.pallas_call(
        _mlp_kernel,
        out_shape=jax.ShapeDtypeStruct((b_padded, 1), jnp.float32),
        grid=grid,
        in_specs=[
            pl.BlockSpec((tile, in_features), lambda i: (i, 0)),    # x: batch-tiled
            pl.BlockSpec((in_features, H), lambda i: (0, 0)),       # w1: resident
            pl.BlockSpec((1, H), lambda i: (0, 0)),                 # b1: resident
            pl.BlockSpec((1, H), lambda i: (0, 0)),                 # w2 row: resident
            pl.BlockSpec(memory_space=pltpu.MemorySpace.SMEM),      # b2: SMEM scalar
        ],
        out_specs=pl.BlockSpec((tile, 1), lambda i: (i, 0)),
        compiler_params=pltpu.CompilerParams(
            dimension_semantics=("parallel",)),
    )(x_bf, w1_bf, b1_row, w2_row, b2_s)
    return out[:B]


def init_params(key, input_size, last_linear_size):
    """Deterministic init mirroring nn.Linear (uniform(-1/sqrt(fan_in), 1/sqrt(fan_in)))."""
    k1, k2, k3, k4 = jax.random.split(key, 4)
    bound1 = 1.0 / jnp.sqrt(jnp.float32(input_size))
    bound2 = 1.0 / jnp.sqrt(jnp.float32(last_linear_size))
    # stored already transposed to (in, out) for the kernel
    w1 = jax.random.uniform(k1, (input_size, last_linear_size), jnp.float32,
                            -bound1, bound1)
    b1 = jax.random.uniform(k2, (1, last_linear_size), jnp.float32, -bound1, bound1)
    w2 = jax.random.uniform(k3, (last_linear_size, 1), jnp.float32, -bound2, bound2)
    b2 = jax.random.uniform(k4, (1, 1), jnp.float32, -bound2, bound2)
    return w1, b1, w2, b2


if __name__ == "__main__":
    input_size = 32
    last_linear_size = 16
    batch = 256          # small demo; tile_b=128 below exercises a 2-step grid

    key = jax.random.PRNGKey(0)
    kx, kp = jax.random.split(key)
    x = jax.random.normal(kx, (batch, input_size), jnp.float32)
    w1, b1, w2, b2 = init_params(kp, input_size, last_linear_size)

    out = meta_mortality_forward(x, w1, b1, w2, b2, tile_b=128)
    out = jax.block_until_ready(out)

    # Pure-JAX reference using the same bf16 rounding of the streamed operands.
    x_r = x.astype(jnp.bfloat16).astype(jnp.float32)
    w1_r = w1.astype(jnp.bfloat16).astype(jnp.float32)
    h_ref = jnp.maximum(x_r @ w1_r + b1, 0.0)
    ref = jax.nn.sigmoid(h_ref @ w2 + b2)

    assert out.shape == (batch, 1)
    assert jnp.allclose(out, ref, atol=1e-4, rtol=1e-4), float(
        jnp.max(jnp.abs(out - ref)))

    print("KERNEL_OK")
</pallas_src>

<mosaic_0001>
module attributes {stable_mosaic.version = 11 : i64} {
  func.func @_mlp_kernel(%arg0: i32, %arg1: memref<128x32xbf16, #tpu.memory_space<vmem>>, %arg2: memref<32x16xbf16, #tpu.memory_space<vmem>>, %arg3: memref<1x16xf32, #tpu.memory_space<vmem>>, %arg4: memref<1x16xf32, #tpu.memory_space<vmem>>, %arg5: memref<1x1xf32, #tpu.memory_space<smem>>, %arg6: memref<128x1xf32, #tpu.memory_space<vmem>>) attributes {dimension_semantics = [#tpu.dimension_semantics<parallel>], iteration_bounds = array<i64: 2>, scalar_prefetch = 0 : i64, scratch_operands = 0 : i64, tpu.core_type = #tpu.core_type<tc>, window_params = [{transform_indices = @transform_0, window_bounds = array<i64: 128, 32>}, {pipeline_mode = #tpu.pipeline_mode<synchronous>, transform_indices = @transform_1, window_bounds = array<i64: 32, 16>}, {pipeline_mode = #tpu.pipeline_mode<synchronous>, transform_indices = @transform_2, window_bounds = array<i64: 1, 16>}, {pipeline_mode = #tpu.pipeline_mode<synchronous>, transform_indices = @transform_3, window_bounds = array<i64: 1, 16>}, {transform_indices = @transform_4, window_bounds = array<i64: 1, 1>}, {transform_indices = @transform_5, window_bounds = array<i64: 128, 1>}]} {
    %c0 = arith.constant 0 : index
    %c0_0 = arith.constant 0 : index
    %0 = vector.load %arg1[%c0, %c0_0] : memref<128x32xbf16, #tpu.memory_space<vmem>>, vector<128x32xbf16>
    %c0_1 = arith.constant 0 : index
    %c0_2 = arith.constant 0 : index
    %1 = vector.load %arg2[%c0_1, %c0_2] : memref<32x16xbf16, #tpu.memory_space<vmem>>, vector<32x16xbf16>
    %cst = arith.constant dense<0.000000e+00> : vector<128x16xf32>
    %2 = tpu.matmul %0, %1, %cst {dimension_numbers = #tpu.dot_dimension_numbers<[1], [0], [0], [1], [0, 0, 1, 1], [], []>} : vector<128x32xbf16>, vector<32x16xbf16>, vector<128x16xf32> -> vector<128x16xf32>
    %c0_3 = arith.constant 0 : index
    %c0_4 = arith.constant 0 : index
    %3 = vector.load %arg3[%c0_3, %c0_4] : memref<1x16xf32, #tpu.memory_space<vmem>>, vector<1x16xf32>
    %4 = vector.broadcast %3 : vector<1x16xf32> to vector<128x16xf32>
    %5 = arith.addf %2, %4 : vector<128x16xf32>
    %cst_5 = arith.constant 0.000000e+00 : f32
    %6 = vector.broadcast %cst_5 : f32 to vector<128x16xf32>
    %7 = arith.maximumf %5, %6 : vector<128x16xf32>
    %c0_6 = arith.constant 0 : index
    %c0_7 = arith.constant 0 : index
    %8 = vector.load %arg4[%c0_6, %c0_7] : memref<1x16xf32, #tpu.memory_space<vmem>>, vector<1x16xf32>
    %9 = vector.broadcast %8 : vector<1x16xf32> to vector<128x16xf32>
    %10 = arith.mulf %7, %9 : vector<128x16xf32>
    %cst_8 = arith.constant dense<0.000000e+00> : vector<128xf32>
    %11 = vector.multi_reduction <add>, %10, %cst_8 [1] : vector<128x16xf32> to vector<128xf32>
    %12 = vector.shape_cast %11 : vector<128xf32> to vector<128x1xf32>
    %c0_9 = arith.constant 0 : index
    %c0_10 = arith.constant 0 : index
    %13 = memref.load %arg5[%c0_9, %c0_10] : memref<1x1xf32, #tpu.memory_space<smem>>
    %14 = vector.broadcast %13 : f32 to vector<128x1xf32>
    %15 = arith.addf %12, %14 : vector<128x1xf32>
    %16 = arith.negf %15 : vector<128x1xf32>
    %17 = math.exp %16 : vector<128x1xf32>
    %cst_11 = arith.constant 1.000000e+00 : f32
    %18 = vector.broadcast %cst_11 : f32 to vector<128x1xf32>
    %19 = arith.addf %18, %17 : vector<128x1xf32>
    %20 = arith.divf %18, %19 : vector<128x1xf32>
    %c0_12 = arith.constant 0 : index
    %c0_13 = arith.constant 0 : index
    %21 = vector.load %arg6[%c0_12, %c0_13] : memref<128x1xf32, #tpu.memory_space<vmem>>, vector<128x1xf32>
    tpu.vector_store %arg6[%c0_12, %c0_13], %20 {strides = array<i32>} : memref<128x1xf32, #tpu.memory_space<vmem>>, vector<128x1xf32>,
    return
  }
  func.func @transform_0(%arg0: i32) -> (i32, i32) {
    %c0_i32 = arith.constant 0 : i32
    %c0_i32_0 = arith.constant 0 : i32
    return %arg0, %c0_i32 : i32, i32
  }
  func.func @transform_1(%arg0: i32) -> (i32, i32) {
    %c0_i32 = arith.constant 0 : i32
    %c0_i32_0 = arith.constant 0 : i32
    %c0_i32_1 = arith.constant 0 : i32
    return %c0_i32, %c0_i32_0 : i32, i32
  }
  func.func @transform_2(%arg0: i32) -> (i32, i32) {
    %c0_i32 = arith.constant 0 : i32
    %c0_i32_0 = arith.constant 0 : i32
    %c0_i32_1 = arith.constant 0 : i32
    return %c0_i32, %c0_i32_0 : i32, i32
  }
  func.func @transform_3(%arg0: i32) -> (i32, i32) {
    %c0_i32 = arith.constant 0 : i32
    %c0_i32_0 = arith.constant 0 : i32
    %c0_i32_1 = arith.constant 0 : i32
    return %c0_i32, %c0_i32_0 : i32, i32
  }
  func.func @transform_4(%arg0: i32) -> (i32, i32) {
    %c0_i32 = arith.constant 0 : i32
    %c0_i32_0 = arith.constant 0 : i32
    %c0_i32_1 = arith.constant 0 : i32
    return %c0_i32, %c0_i32_0 : i32, i32
  }
  func.func @transform_5(%arg0: i32) -> (i32, i32) {
    %c0_i32 = arith.constant 0 : i32
    %c0_i32_0 = arith.constant 0 : i32
    return %arg0, %c0_i32 : i32, i32
  }
}

</mosaic_0001>

<llo_original>
// kernel: tpu_custom_call.1
$region0: #{tpu_custom_call.1}
  #allocation0 [shape = 'u32[]', space=smem, size = 0x4, offset = 0x4, fixed_abs, tag = 'smem constant byte address 0x4 - core index']
  #allocation1 [shape = 'u32[72,128]{1,0:T(1,128)}', space=vmem, size = 0x9000, scoped, tag = 'internal scratch']
  #allocation2 [shape = 'f32[1,1]{1,0:T(1,128)S(6)}', space=smem, size = 0x200, scoped, tag = 'scoped memory for tpu_custom_call.1']
  %s0 = inlined_call_operand.vmem [shape: bf16[256,32], index: 0, kind: input, shape index: {}]
  %s1 = inlined_call_operand.vmem [shape: bf16[32,16], index: 1, kind: input, shape index: {}]
  %s2 = inlined_call_operand.vmem [shape: f32[1,16], index: 2, kind: input, shape index: {}]
  %s3 = inlined_call_operand.vmem [shape: f32[1,16], index: 3, kind: input, shape index: {}]
  %s4 = inlined_call_operand.<no memory space> [shape: f32[1,1], index: 4, kind: input, shape index: {}]
  %s5 = inlined_call_operand.vmem [shape: f32[256,1], index: 5, kind: output, shape index: {}]
  %s6 = sld [smem:[#allocation0]]
  $region53: #{tpu_custom_call.1} parent=0
    _
  %s8 = ssub.s32 1, %s6
  %s9 = scalar_select 0, %s8, %s6
  %10 = sst [smem:[#allocation2]] %s4
  loop: start=0, step=1, limit=4
  $region2: #{tpu_custom_call.1} parent=0 // loop_pre_header
    _
  $region3: #{tpu_custom_call.1} parent=0 // loop_header
    %s12 = sphi 0, %s16
    %p13 = scmp.ge.s32.totalorder %s12, 4
    %s22 = sphi 0, %s24
    %s25 = sphi 0, %s22
    %s26 = sphi 0, %s25
    %s42 = sphi 0, %s26
    %s46 = sphi 0, %s46
    %s48 = sphi 0, %s46
    %s49 = sphi 0, %s48
    %s63 = sphi 0, %s49
    %s67 = sphi 0, %s67
    %s69 = sphi 0, %s67
    %s70 = sphi 0, %s69
    %s84 = sphi 0, %s70
    %s88 = sphi 0, %s88
    %s90 = sphi 0, %s88
    %s91 = sphi 0, %s90
    %s105 = sphi 0, %s91
    %s109 = sphi 0, %s109
    %s111 = sphi 0, %s109
    %s112 = sphi 0, %s111
    %s126 = sphi 0, %s112
    %s132 = sphi 0, %s134
    %s135 = sphi 0, %s132
    %s136 = sphi 0, %s135
    %s152 = sphi 0, %s136
  $region4: #{tpu_custom_call.1} parent=0 // loop_header_branch
    %15 = sbr.rel (%p13) target = $region8
  $region5: #{tpu_custom_call.1} parent=0 // loop_body
    %s17 = ssub.s32 %s12, 1
    %s18 = ssub.s32 %s12, 2
    %s19 = sadd.s32 %s12, 1
    %s20 = ssub.s32 %s12, %s19
    %p21 = scmp.eq.s32.totalorder %s20, 0
    %s23 = sadd.s32 %s22, 1
    %s24 = scalar_select %p21, %s22, %s23
    %p27 = pneg %p21
    %p28 = scmp.eq.s32.totalorder %s12, 1
    %p29 = por %p27, %p28
    %p30 = scmp.ne.s32.totalorder %s22, %s25
    %p31 = scmp.eq.s32.totalorder %s12, 0
    %p32 = por %p30, %p31
    %p33 = scmp.ne.s32.totalorder %s22, %s25
    %p34 = scmp.eq.s32.totalorder %s17, 1
    %p35 = por %p33, %p34
    %p36 = scmp.ne.s32.totalorder %s25, %s26
    %p37 = scmp.eq.s32.totalorder %s17, 0
    %p38 = por %p36, %p37
    %p39 = scmp.ne.s32.totalorder %s25, %s26
    %p40 = scmp.eq.s32.totalorder %s18, 1
    %p41 = por %p39, %p40
    %p43 = scmp.ne.s32.totalorder %s26, %s42
    %p44 = scmp.eq.s32.totalorder %s18, 0
    %p45 = por %p43, %p44
    %s47 = sadd.s32 %s46, 1
    %p50 = scmp.eq.s32.totalorder %s12, 1
    %p51 = scmp.ne.s32.totalorder %s46, %s48
    %p52 = scmp.eq.s32.totalorder %s12, 0
    %p53 = por %p51, %p52
    %p54 = scmp.ne.s32.totalorder %s46, %s48
    %p55 = scmp.eq.s32.totalorder %s17, 1
    %p56 = por %p54, %p55
    %p57 = scmp.ne.s32.totalorder %s48, %s49
    %p58 = scmp.eq.s32.totalorder %s17, 0
    %p59 = por %p57, %p58
    %p60 = scmp.ne.s32.totalorder %s48, %s49
    %p61 = scmp.eq.s32.totalorder %s18, 1
    %p62 = por %p60, %p61
    %p64 = scmp.ne.s32.totalorder %s49, %s63
    %p65 = scmp.eq.s32.totalorder %s18, 0
    %p66 = por %p64, %p65
    %s68 = sadd.s32 %s67, 1
    %p71 = scmp.eq.s32.totalorder %s12, 1
    %p72 = scmp.ne.s32.totalorder %s67, %s69
    %p73 = scmp.eq.s32.totalorder %s12, 0
    %p74 = por %p72, %p73
    %p75 = scmp.ne.s32.totalorder %s67, %s69
    %p76 = scmp.eq.s32.totalorder %s17, 1
    %p77 = por %p75, %p76
    %p78 = scmp.ne.s32.totalorder %s69, %s70
    %p79 = scmp.eq.s32.totalorder %s17, 0
    %p80 = por %p78, %p79
    %p81 = scmp.ne.s32.totalorder %s69, %s70
    %p82 = scmp.eq.s32.totalorder %s18, 1
    %p83 = por %p81, %p82
    %p85 = scmp.ne.s32.totalorder %s70, %s84
    %p86 = scmp.eq.s32.totalorder %s18, 0
    %p87 = por %p85, %p86
    %s89 = sadd.s32 %s88, 1
    %p92 = scmp.eq.s32.totalorder %s12, 1
    %p93 = scmp.ne.s32.totalorder %s88, %s90
    %p94 = scmp.eq.s32.totalorder %s12, 0
    %p95 = por %p93, %p94
    %p96 = scmp.ne.s32.totalorder %s88, %s90
    %p97 = scmp.eq.s32.totalorder %s17, 1
    %p98 = por %p96, %p97
    %p99 = scmp.ne.s32.totalorder %s90, %s91
    %p100 = scmp.eq.s32.totalorder %s17, 0
    %p101 = por %p99, %p100
    %p102 = scmp.ne.s32.totalorder %s90, %s91
    %p103 = scmp.eq.s32.totalorder %s18, 1
    %p104 = por %p102, %p103
    %p106 = scmp.ne.s32.totalorder %s91, %s105
    %p107 = scmp.eq.s32.totalorder %s18, 0
    %p108 = por %p106, %p107
    %s110 = sadd.s32 %s109, 1
    %p113 = scmp.eq.s32.totalorder %s12, 1
    %p114 = scmp.ne.s32.totalorder %s109, %s111
    %p115 = scmp.eq.s32.totalorder %s12, 0
    %p116 = por %p114, %p115
    %p117 = scmp.ne.s32.totalorder %s109, %s111
    %p118 = scmp.eq.s32.totalorder %s17, 1
    %p119 = por %p117, %p118
    %p120 = scmp.ne.s32.totalorder %s111, %s112
    %p121 = scmp.eq.s32.totalorder %s17, 0
    %p122 = por %p120, %p121
    %p123 = scmp.ne.s32.totalorder %s111, %s112
    %p124 = scmp.eq.s32.totalorder %s18, 1
    %p125 = por %p123, %p124
    %p127 = scmp.ne.s32.totalorder %s112, %s126
    %p128 = scmp.eq.s32.totalorder %s18, 0
    %p129 = por %p127, %p128
    %s130 = ssub.s32 %s12, %s19
    %p131 = scmp.eq.s32.totalorder %s130, 0
    %s133 = sadd.s32 %s132, 1
    %s134 = scalar_select %p131, %s132, %s133
    %p137 = pneg %p131
    %p138 = scmp.eq.s32.totalorder %s12, 1
    %p139 = por %p137, %p138
    %p140 = scmp.ne.s32.totalorder %s132, %s135
    %p141 = scmp.eq.s32.totalorder %s12, 0
    %p142 = por %p140, %p141
    %p143 = scmp.ne.s32.totalorder %s132, %s135
    %p144 = scmp.eq.s32.totalorder %s17, 1
    %p145 = por %p143, %p144
    %p146 = scmp.ne.s32.totalorder %s135, %s136
    %p147 = scmp.eq.s32.totalorder %s17, 0
    %p148 = por %p146, %p147
    %p149 = scmp.ne.s32.totalorder %s135, %s136
    %p150 = scmp.eq.s32.totalorder %s18, 1
    %p151 = por %p149, %p150
    %p153 = scmp.ne.s32.totalorder %s136, %s152
    %p154 = scmp.eq.s32.totalorder %s18, 0
    %p155 = por %p153, %p154
    %p156 = scmp.le.s32.totalorder 1, %s12
    %p157 = scmp.lt.s32.totalorder %s12, 3
    %p158 = pnand %p156, %p157
    %p159 = pneg %p158
    // Predicated region
    $region9: #{tpu_custom_call.1} parent=5 // pred_check
      _
    $region10: #{tpu_custom_call.1} parent=5 // pred_check_branch
      %161 = sbr.rel (%p158) target = $region12
    $region11: #{tpu_custom_call.1} parent=5 // pred_region
      %s162 = ssub.s32 %s12, 1
      // Predicated region
      $region13: #{tpu_custom_call.1} parent=11 // pred_check
        %p163 = pneg %p59
      $region14: #{tpu_custom_call.1} parent=11 // pred_check_branch
        %165 = sbr.rel (%p163) target = $region16
      $region15: #{tpu_custom_call.1} parent=11 // pred_region
        _
      $region16: #{tpu_custom_call.1} parent=11 // pred_fallthru
        _
      // Predicated region
      $region17: #{tpu_custom_call.1} parent=11 // pred_check
        %p166 = pneg %p80
      $region18: #{tpu_custom_call.1} parent=11 // pred_check_branch
        %168 = sbr.rel (%p166) target = $region20
      $region19: #{tpu_custom_call.1} parent=11 // pred_region
        _
      $region20: #{tpu_custom_call.1} parent=11 // pred_fallthru
        _
      // Predicated region
      $region21: #{tpu_custom_call.1} parent=11 // pred_check
        %p169 = pneg %p101
      $region22: #{tpu_custom_call.1} parent=11 // pred_check_branch
        %171 = sbr.rel (%p169) target = $region24
      $region23: #{tpu_custom_call.1} parent=11 // pred_region
        _
      $region24: #{tpu_custom_call.1} parent=11 // pred_fallthru
        _
      // Predicated region
      $region25: #{tpu_custom_call.1} parent=11 // pred_check
        %p172 = pneg %p122
      $region26: #{tpu_custom_call.1} parent=11 // pred_check_branch
        %174 = sbr.rel (%p172) target = $region28
      $region27: #{tpu_custom_call.1} parent=11 // pred_region
        _
      $region28: #{tpu_custom_call.1} parent=11 // pred_fallthru
        _
    $region12: #{tpu_custom_call.1} parent=5 // pred_fallthru
      _
    %p175 = scmp.lt.s32.totalorder %s12, 2
    // Predicated region
    $region29: #{tpu_custom_call.1} parent=5 // pred_check
      %p176 = pneg %p175
    $region30: #{tpu_custom_call.1} parent=5 // pred_check_branch
      %178 = sbr.rel (%p176) target = $region32
    $region31: #{tpu_custom_call.1} parent=5 // pred_region
      // Predicated region
      $region33: #{tpu_custom_call.1} parent=31 // pred_check
        %p179 = pneg %p32
      $region34: #{tpu_custom_call.1} parent=31 // pred_check_branch
        %181 = sbr.rel (%p179) target = $region36
      $region35: #{tpu_custom_call.1} parent=31 // pred_region
        %s182 = smul.u32 16, %s12
        %p183 = scmp.lt.s32.totalorder %s182, 31
        %s184 = scalar_select %p183, %s182, 31
        %s185 = smul.addr %s184, 4
        %s186 = scalar_lea.vmem %s0, %s185
        %s187 = smul.u32 16, %s12
      $region36: #{tpu_custom_call.1} parent=31 // pred_fallthru
        _
    $region32: #{tpu_custom_call.1} parent=5 // pred_fallthru
      _
    %p188 = scmp.le.s32.totalorder 1, %s12
    %p189 = scmp.lt.s32.totalorder %s12, 3
    %p190 = pnand %p188, %p189
    %p191 = pneg %p190
    // Predicated region
    $region37: #{tpu_custom_call.1} parent=5 // pred_check
      _
    $region38: #{tpu_custom_call.1} parent=5 // pred_check_branch
      %193 = sbr.rel (%p190) target = $region40
    $region39: #{tpu_custom_call.1} parent=5 // pred_region
      %s194 = ssub.s32 %s12, 1
      %s195 = smul.u32 16, %s17
      %p196 = scmp.lt.s32.totalorder %s195, 31
      %s197 = scalar_select %p196, %s195, 31
      %s198 = smul.addr %s197, 4
      %s199 = scalar_lea.vmem %s0, %s198
      %p200 = pneg %p38
      %p201 = pneg %p35
      %p202 = pneg %p59
      %p203 = pneg %p56
      %p204 = pneg %p80
      %p205 = pneg %p77
      %p206 = pneg %p101
      %p207 = pneg %p98
      %p208 = pneg %p122
      %p209 = pneg %p119
      %p210 = pneg %p148
      %p211 = pneg %p145
      %s212 = smul.u32 16, %s17
      %p213 = scmp.lt.s32.totalorder %s212, 31
      %s214 = scalar_select %p213, %s212, 31
      %s215 = smul.addr %s214, 8
      %s216 = scalar_lea.vmem %s5, %s215
      %s217 = smul.u32 16, %s17
      %p218 = scmp.lt.s32.totalorder %s217, 31
      %s219 = scalar_select %p218, %s217, 31
      %s220 = smul.addr %s219, 4
      %s221 = scalar_lea.vmem %s0, %s220
      %s222 = smul.u32 16, %s17
      %s223 = smul.u32 16, %s17
      %p224 = scmp.lt.s32.totalorder %s223, 31
      %s225 = scalar_select %p224, %s223, 31
      %s226 = smul.addr %s225, 8
      %s227 = scalar_lea.vmem %s5, %s226
      %s228 = smul.u32 16, %s17
      %v230 = vld [vmem:[%s221] sm:$0xf]
      %v231 = vld [vmem:[%s221 + $0x4] sm:$0xf]
      %v232 = vld [vmem:[%s221 + $0x8] sm:$0xf]
      %v233 = vld [vmem:[%s221 + $0xc] sm:$0xf]
      %v234 = vld [vmem:[%s221 + $0x10] sm:$0xf]
      %v235 = vld [vmem:[%s221 + $0x14] sm:$0xf]
      %v236 = vld [vmem:[%s221 + $0x18] sm:$0xf]
      %v237 = vld [vmem:[%s221 + $0x1c] sm:$0xf]
      %v238 = vld [vmem:[%s221 + $0x20] sm:$0xf]
      %v239 = vld [vmem:[%s221 + $0x24] sm:$0xf]
      %v240 = vld [vmem:[%s221 + $0x28] sm:$0xf]
      %v241 = vld [vmem:[%s221 + $0x2c] sm:$0xf]
      %v242 = vld [vmem:[%s221 + $0x30] sm:$0xf]
      %v243 = vld [vmem:[%s221 + $0x34] sm:$0xf]
      %v244 = vld [vmem:[%s221 + $0x38] sm:$0xf]
      %v245 = vld [vmem:[%s221 + $0x3c] sm:$0xf]
      %v246 = vld [vmem:[%s1] sm:$0xf]
      %v247 = vld [vmem:[%s1 + $0x4] sm:$0xf]
      %v248 = vld [vmem:[%s1 + $0x8] sm:$0xf]
      %v249 = vld [vmem:[%s1 + $0xc] sm:$0xf]
      %v250 = vld [vmem:[%s2] sm:$0x1]
      %v252 = vperm.slane %v250, 0
      %v270 = vunpack.c.l.b16 %v230
      %v271 = vunpack.c.l.b16 %v231
      %v272 = vunpack.c.l.b16 %v232
      %v273 = vunpack.c.l.b16 %v233
      %v274 = vunpack.c.l.b16 %v234
      %v275 = vunpack.c.l.b16 %v235
      %v276 = vunpack.c.l.b16 %v236
      %v277 = vunpack.c.l.b16 %v237
      %v278 = vunpack.c.l.b16 %v238
      %v279 = vunpack.c.l.b16 %v239
      %v280 = vunpack.c.l.b16 %v240
      %v281 = vunpack.c.l.b16 %v241
      %v282 = vunpack.c.l.b16 %v242
      %v283 = vunpack.c.l.b16 %v243
      %v284 = vunpack.c.l.b16 %v244
      %v285 = vunpack.c.l.b16 %v245
      %v286 = vpack.c.b16 %v271, %v270
      %v287 = vpack.c.b16 %v273, %v272
      %v288 = vpack.c.b16 %v275, %v274
      %v289 = vpack.c.b16 %v277, %v276
      %v290 = vpack.c.b16 %v279, %v278
      %v291 = vpack.c.b16 %v281, %v280
      %v292 = vpack.c.b16 %v283, %v282
      %v293 = vpack.c.b16 %v285, %v284
      %v298 = vunpack.c.l.b16 %v246
      %v299 = vunpack.c.l.b16 %v247
      %v300 = vunpack.c.l.b16 %v248
      %v301 = vunpack.c.l.b16 %v249
      %v302 = vpack.c.b16 %v299, %v298
      %v303 = vpack.c.b16 %v301, %v300
      %vm306 = vcmask 261120
      %v308 = vsel %vm306, %v286, 0
      %v311 = vsel %vm306, %v287, 0
      %v314 = vsel %vm306, %v288, 0
      %v317 = vsel %vm306, %v289, 0
      %v320 = vsel %vm306, %v290, 0
      %v323 = vsel %vm306, %v291, 0
      %v326 = vsel %vm306, %v292, 0
      %v329 = vsel %vm306, %v293, 0
      %331 = vmatpush.bf16.msra.mxu0 0
      %332 = vmatpush.bf16.msra.mxu0 0
      %333 = vmatpush.bf16.msra.mxu0 0
      %334 = vmatpush.bf16.msra.mxu0 0
      %335 = vmatpush.bf16.msra.mxu0 0
      %336 = vmatpush.bf16.msra.mxu0 0
      %337 = vmatpush.bf16.msra.mxu0 %v303
      %338 = vmatpush.bf16.msra.mxu0 %v302
      %339 = vmatmul.bf16.gmra.mxu0 %v308
      %v340 = vpop.f32.mrf.mxu0
      %v341 = vadd.f32 %v252, %v340
      %v342 = vpop.f32.mrf.mxu0
      %v343 = vadd.f32 %v252, %v342
      %344 = vmatmul.bf16.gmra.mxu0 %v311
      %v345 = vpop.f32.mrf.mxu0
      %v346 = vadd.f32 %v252, %v345
      %v347 = vpop.f32.mrf.mxu0
      %v348 = vadd.f32 %v252, %v347
      %349 = vmatmul.bf16.gmra.mxu0 %v314
      %v350 = vpop.f32.mrf.mxu0
      %v351 = vadd.f32 %v252, %v350
      %v352 = vpop.f32.mrf.mxu0
      %v353 = vadd.f32 %v252, %v352
      %354 = vmatmul.bf16.gmra.mxu0 %v317
      %v355 = vpop.f32.mrf.mxu0
      %v356 = vadd.f32 %v252, %v355
      %v357 = vpop.f32.mrf.mxu0
      %v358 = vadd.f32 %v252, %v357
      %359 = vmatmul.bf16.gmra.mxu0 %v320
      %v360 = vpop.f32.mrf.mxu0
      %v361 = vadd.f32 %v252, %v360
      %v362 = vpop.f32.mrf.mxu0
      %v363 = vadd.f32 %v252, %v362
      %364 = vmatmul.bf16.gmra.mxu0 %v323
      %v365 = vpop.f32.mrf.mxu0
      %v366 = vadd.f32 %v252, %v365
      %v367 = vpop.f32.mrf.mxu0
      %v368 = vadd.f32 %v252, %v367
      %369 = vmatmul.bf16.gmra.mxu0 %v326
      %v370 = vpop.f32.mrf.mxu0
      %v371 = vadd.f32 %v252, %v370
      %v372 = vpop.f32.mrf.mxu0
      %v373 = vadd.f32 %v252, %v372
      %374 = vmatmul.bf16.gmra.mxu0 %v329
      %v375 = vpop.f32.mrf.mxu0
      %v376 = vadd.f32 %v252, %v375
      %v377 = vpop.f32.mrf.mxu0
      %v378 = vadd.f32 %v252, %v377
      %379 = vdwg.mxu0
      %v380 = vmax.f32 %v341, 0.0
      %v381 = vmax.f32 %v343, 0.0
      %v382 = vmax.f32 %v346, 0.0
      %v383 = vmax.f32 %v348, 0.0
      %v384 = vmax.f32 %v351, 0.0
      %v385 = vmax.f32 %v353, 0.0
      %v386 = vmax.f32 %v356, 0.0
      %v387 = vmax.f32 %v358, 0.0
      %v388 = vmax.f32 %v361, 0.0
      %v389 = vmax.f32 %v363, 0.0
      %v390 = vmax.f32 %v366, 0.0
      %v391 = vmax.f32 %v368, 0.0
      %v392 = vmax.f32 %v371, 0.0
      %v393 = vmax.f32 %v373, 0.0
      %v394 = vmax.f32 %v376, 0.0
      %v395 = vmax.f32 %v378, 0.0
      %v396 = vld [vmem:[%s3] sm:$0x1]
      %v398 = vperm.slane %v396, 0
      %v400 = vmul.f32 %v380, %v398
      %v401 = vmul.f32 %v381, %v398
      %v402 = vmul.f32 %v382, %v398
      %v403 = vmul.f32 %v383, %v398
      %v404 = vmul.f32 %v384, %v398
      %v405 = vmul.f32 %v385, %v398
      %v406 = vmul.f32 %v386, %v398
      %v407 = vmul.f32 %v387, %v398
      %v408 = vmul.f32 %v388, %v398
      %v409 = vmul.f32 %v389, %v398
      %v410 = vmul.f32 %v390, %v398
      %v411 = vmul.f32 %v391, %v398
      %v412 = vmul.f32 %v392, %v398
      %v413 = vmul.f32 %v393, %v398
      %v414 = vmul.f32 %v394, %v398
      %v415 = vmul.f32 %v395, %v398
      %vm416 = vcmask 130048
      %v417 = vsel %vm416, %v400, 0.0
      %418 = vadd.xlane.f32.xlu0 %v417
      %v419 = vpop.xlane.xlu0 %418
      %v420 = vsel %vm416, %v401, 0.0
      %421 = vadd.xlane.f32.xlu0 %v420
      %v422 = vpop.xlane.xlu0 %421
      %v423 = vsel %vm416, %v402, 0.0
      %424 = vadd.xlane.f32.xlu0 %v423
      %v425 = vpop.xlane.xlu0 %424
      %v426 = vsel %vm416, %v403, 0.0
      %427 = vadd.xlane.f32.xlu0 %v426
      %v428 = vpop.xlane.xlu0 %427
      %v429 = vsel %vm416, %v404, 0.0
      %430 = vadd.xlane.f32.xlu0 %v429
      %v431 = vpop.xlane.xlu0 %430
      %v432 = vsel %vm416, %v405, 0.0
      %433 = vadd.xlane.f32.xlu0 %v432
      %v434 = vpop.xlane.xlu0 %433
      %v435 = vsel %vm416, %v406, 0.0
      %436 = vadd.xlane.f32.xlu0 %v435
      %v437 = vpop.xlane.xlu0 %436
      %v438 = vsel %vm416, %v407, 0.0
      %439 = vadd.xlane.f32.xlu0 %v438
      %v440 = vpop.xlane.xlu0 %439
      %v441 = vsel %vm416, %v408, 0.0
      %442 = vadd.xlane.f32.xlu0 %v441
      %v443 = vpop.xlane.xlu0 %442
      %v444 = vsel %vm416, %v409, 0.0
      %445 = vadd.xlane.f32.xlu0 %v444
      %v446 = vpop.xlane.xlu0 %445
      %v447 = vsel %vm416, %v410, 0.0
      %448 = vadd.xlane.f32.xlu0 %v447
      %v449 = vpop.xlane.xlu0 %448
      %v450 = vsel %vm416, %v411, 0.0
      %451 = vadd.xlane.f32.xlu0 %v450
      %v452 = vpop.xlane.xlu0 %451
      %v453 = vsel %vm416, %v412, 0.0
      %454 = vadd.xlane.f32.xlu0 %v453
      %v455 = vpop.xlane.xlu0 %454
      %v456 = vsel %vm416, %v413, 0.0
      %457 = vadd.xlane.f32.xlu0 %v456
      %v458 = vpop.xlane.xlu0 %457
      %v459 = vsel %vm416, %v414, 0.0
      %460 = vadd.xlane.f32.xlu0 %v459
      %v461 = vpop.xlane.xlu0 %460
      %v462 = vsel %vm416, %v415, 0.0
      %463 = vadd.xlane.f32.xlu0 %v462
      %v464 = vpop.xlane.xlu0 %463
      %s465 = sld [smem:[#allocation2]]
      %v466 = vstv %s465
      %v467 = vadd.f32 %v419, %v466
      %v468 = vadd.f32 %v422, %v466
      %v469 = vadd.f32 %v425, %v466
      %v470 = vadd.f32 %v428, %v466
      %v471 = vadd.f32 %v431, %v466
      %v472 = vadd.f32 %v434, %v466
      %v473 = vadd.f32 %v437, %v466
      %v474 = vadd.f32 %v440, %v466
      %v475 = vadd.f32 %v443, %v466
      %v476 = vadd.f32 %v446, %v466
      %v477 = vadd.f32 %v449, %v466
      %v478 = vadd.f32 %v452, %v466
      %v479 = vadd.f32 %v455, %v466
      %v480 = vadd.f32 %v458, %v466
      %v481 = vadd.f32 %v461, %v466
      %v482 = vadd.f32 %v464, %v466
      %v483 = vxor.u32 %v467, 2147483648
      %v484 = vxor.u32 %v468, 2147483648
      %v485 = vxor.u32 %v469, 2147483648
      %v486 = vxor.u32 %v470, 2147483648
      %v487 = vxor.u32 %v471, 2147483648
      %v488 = vxor.u32 %v472, 2147483648
      %v489 = vxor.u32 %v473, 2147483648
      %v490 = vxor.u32 %v474, 2147483648
      %v491 = vxor.u32 %v475, 2147483648
      %v492 = vxor.u32 %v476, 2147483648
      %v493 = vxor.u32 %v477, 2147483648
      %v494 = vxor.u32 %v478, 2147483648
      %v495 = vxor.u32 %v479, 2147483648
      %v496 = vxor.u32 %v480, 2147483648
      %v497 = vxor.u32 %v481, 2147483648
      %v498 = vxor.u32 %v482, 2147483648
      %v499 = vmul.f32 %v483, 1.442695
      %v500 = vpow.pop %v499
      %v501 = vmul.f32 %v484, 1.442695
      %v502 = vpow.pop %v501
      %v503 = vmul.f32 %v485, 1.442695
      %v504 = vpow.pop %v503
      %v505 = vmul.f32 %v486, 1.442695
      %v506 = vpow.pop %v505
      %v507 = vmul.f32 %v487, 1.442695
      %v508 = vpow.pop %v507
      %v509 = vmul.f32 %v488, 1.442695
      %v510 = vpow.pop %v509
      %v511 = vmul.f32 %v489, 1.442695
      %v512 = vpow.pop %v511
      %v513 = vmul.f32 %v490, 1.442695
      %v514 = vpow.pop %v513
      %v515 = vmul.f32 %v491, 1.442695
      %v516 = vpow.pop %v515
      %v517 = vmul.f32 %v492, 1.442695
      %v518 = vpow.pop %v517
      %v519 = vmul.f32 %v493, 1.442695
      %v520 = vpow.pop %v519
      %v521 = vmul.f32 %v494, 1.442695
      %v522 = vpow.pop %v521
      %v523 = vmul.f32 %v495, 1.442695
      %v524 = vpow.pop %v523
      %v525 = vmul.f32 %v496, 1.442695
      %v526 = vpow.pop %v525
      %v527 = vmul.f32 %v497, 1.442695
      %v528 = vpow.pop %v527
      %v529 = vmul.f32 %v498, 1.442695
      %v530 = vpow.pop %v529
      %v531 = vadd.f32 %v500, 1.0
      %v532 = vadd.f32 %v502, 1.0
      %v533 = vadd.f32 %v504, 1.0
      %v534 = vadd.f32 %v506, 1.0
      %v535 = vadd.f32 %v508, 1.0
      %v536 = vadd.f32 %v510, 1.0
      %v537 = vadd.f32 %v512, 1.0
      %v538 = vadd.f32 %v514, 1.0
      %v539 = vadd.f32 %v516, 1.0
      %v540 = vadd.f32 %v518, 1.0
      %v541 = vadd.f32 %v520, 1.0
      %v542 = vadd.f32 %v522, 1.0
      %v543 = vadd.f32 %v524, 1.0
      %v544 = vadd.f32 %v526, 1.0
      %v545 = vadd.f32 %v528, 1.0
      %v546 = vadd.f32 %v530, 1.0
      %v547 = vrcp.pop %v531
      %v548 = vmul.f32 %v531, %v547
      %v549 = vsub.f32 1.0, %v548
      %v550 = vmul.f32 %v547, %v549
      %v551 = vadd.f32 %v547, %v550
      %vm552 = vweird.f32 %v531
      %vm553 = vweird.f32 %v547
      %vm554 = vmor %vm552, %vm553
      %v555 = vsel %vm554, %v547, %v551
      %v556 = vand.u32 2147483647, %v531
      %vm557 = vcmp.eq.f32.partialorder %v556, 8.507059e+37
      %v558 = vand.u32 %v531, 2147483648
      %v559 = vor.u32 1.1754944e-38, %v558
      %v560 = vsel %vm557, %v559, %v555
      %v561 = vmul.f32 1.0, %v560
      %v562 = vrcp.pop %v532
      %v563 = vmul.f32 %v532, %v562
      %v564 = vsub.f32 1.0, %v563
      %v565 = vmul.f32 %v562, %v564
      %v566 = vadd.f32 %v562, %v565
      %vm567 = vweird.f32 %v532
      %vm568 = vweird.f32 %v562
      %vm569 = vmor %vm567, %vm568
      %v570 = vsel %vm569, %v562, %v566
      %v571 = vand.u32 2147483647, %v532
      %vm572 = vcmp.eq.f32.partialorder %v571, 8.507059e+37
      %v573 = vand.u32 %v532, 2147483648
      %v574 = vor.u32 1.1754944e-38, %v573
      %v575 = vsel %vm572, %v574, %v570
      %v576 = vmul.f32 1.0, %v575
      %v577 = vrcp.pop %v533
      %v578 = vmul.f32 %v533, %v577
      %v579 = vsub.f32 1.0, %v578
      %v580 = vmul.f32 %v577, %v579
      %v581 = vadd.f32 %v577, %v580
      %vm582 = vweird.f32 %v533
      %vm583 = vweird.f32 %v577
      %vm584 = vmor %vm582, %vm583
      %v585 = vsel %vm584, %v577, %v581
      %v586 = vand.u32 2147483647, %v533
      %vm587 = vcmp.eq.f32.partialorder %v586, 8.507059e+37
      %v588 = vand.u32 %v533, 2147483648
      %v589 = vor.u32 1.1754944e-38, %v588
      %v590 = vsel %vm587, %v589, %v585
      %v591 = vmul.f32 1.0, %v590
      %v592 = vrcp.pop %v534
      %v593 = vmul.f32 %v534, %v592
      %v594 = vsub.f32 1.0, %v593
      %v595 = vmul.f32 %v592, %v594
      %v596 = vadd.f32 %v592, %v595
      %vm597 = vweird.f32 %v534
      %vm598 = vweird.f32 %v592
      %vm599 = vmor %vm597, %vm598
      %v600 = vsel %vm599, %v592, %v596
      %v601 = vand.u32 2147483647, %v534
      %vm602 = vcmp.eq.f32.partialorder %v601, 8.507059e+37
      %v603 = vand.u32 %v534, 2147483648
      %v604 = vor.u32 1.1754944e-38, %v603
      %v605 = vsel %vm602, %v604, %v600
      %v606 = vmul.f32 1.0, %v605
      %v607 = vrcp.pop %v535
      %v608 = vmul.f32 %v535, %v607
      %v609 = vsub.f32 1.0, %v608
      %v610 = vmul.f32 %v607, %v609
      %v611 = vadd.f32 %v607, %v610
      %vm612 = vweird.f32 %v535
      %vm613 = vweird.f32 %v607
      %vm614 = vmor %vm612, %vm613
      %v615 = vsel %vm614, %v607, %v611
      %v616 = vand.u32 2147483647, %v535
      %vm617 = vcmp.eq.f32.partialorder %v616, 8.507059e+37
      %v618 = vand.u32 %v535, 2147483648
      %v619 = vor.u32 1.1754944e-38, %v618
      %v620 = vsel %vm617, %v619, %v615
      %v621 = vmul.f32 1.0, %v620
      %v622 = vrcp.pop %v536
      %v623 = vmul.f32 %v536, %v622
      %v624 = vsub.f32 1.0, %v623
      %v625 = vmul.f32 %v622, %v624
      %v626 = vadd.f32 %v622, %v625
      %vm627 = vweird.f32 %v536
      %vm628 = vweird.f32 %v622
      %vm629 = vmor %vm627, %vm628
      %v630 = vsel %vm629, %v622, %v626
      %v631 = vand.u32 2147483647, %v536
      %vm632 = vcmp.eq.f32.partialorder %v631, 8.507059e+37
      %v633 = vand.u32 %v536, 2147483648
      %v634 = vor.u32 1.1754944e-38, %v633
      %v635 = vsel %vm632, %v634, %v630
      %v636 = vmul.f32 1.0, %v635
      %v637 = vrcp.pop %v537
      %v638 = vmul.f32 %v537, %v637
      %v639 = vsub.f32 1.0, %v638
      %v640 = vmul.f32 %v637, %v639
      %v641 = vadd.f32 %v637, %v640
      %vm642 = vweird.f32 %v537
      %vm643 = vweird.f32 %v637
      %vm644 = vmor %vm642, %vm643
      %v645 = vsel %vm644, %v637, %v641
      %v646 = vand.u32 2147483647, %v537
      %vm647 = vcmp.eq.f32.partialorder %v646, 8.507059e+37
      %v648 = vand.u32 %v537, 2147483648
      %v649 = vor.u32 1.1754944e-38, %v648
      %v650 = vsel %vm647, %v649, %v645
      %v651 = vmul.f32 1.0, %v650
      %v652 = vrcp.pop %v538
      %v653 = vmul.f32 %v538, %v652
      %v654 = vsub.f32 1.0, %v653
      %v655 = vmul.f32 %v652, %v654
      %v656 = vadd.f32 %v652, %v655
      %vm657 = vweird.f32 %v538
      %vm658 = vweird.f32 %v652
      %vm659 = vmor %vm657, %vm658
      %v660 = vsel %vm659, %v652, %v656
      %v661 = vand.u32 2147483647, %v538
      %vm662 = vcmp.eq.f32.partialorder %v661, 8.507059e+37
      %v663 = vand.u32 %v538, 2147483648
      %v664 = vor.u32 1.1754944e-38, %v663
      %v665 = vsel %vm662, %v664, %v660
      %v666 = vmul.f32 1.0, %v665
      %v667 = vrcp.pop %v539
      %v668 = vmul.f32 %v539, %v667
      %v669 = vsub.f32 1.0, %v668
      %v670 = vmul.f32 %v667, %v669
      %v671 = vadd.f32 %v667, %v670
      %vm672 = vweird.f32 %v539
      %vm673 = vweird.f32 %v667
      %vm674 = vmor %vm672, %vm673
      %v675 = vsel %vm674, %v667, %v671
      %v676 = vand.u32 2147483647, %v539
      %vm677 = vcmp.eq.f32.partialorder %v676, 8.507059e+37
      %v678 = vand.u32 %v539, 2147483648
      %v679 = vor.u32 1.1754944e-38, %v678
      %v680 = vsel %vm677, %v679, %v675
      %v681 = vmul.f32 1.0, %v680
      %v682 = vrcp.pop %v540
      %v683 = vmul.f32 %v540, %v682
      %v684 = vsub.f32 1.0, %v683
      %v685 = vmul.f32 %v682, %v684
      %v686 = vadd.f32 %v682, %v685
      %vm687 = vweird.f32 %v540
      %vm688 = vweird.f32 %v682
      %vm689 = vmor %vm687, %vm688
      %v690 = vsel %vm689, %v682, %v686
      %v691 = vand.u32 2147483647, %v540
      %vm692 = vcmp.eq.f32.partialorder %v691, 8.507059e+37
      %v693 = vand.u32 %v540, 2147483648
      %v694 = vor.u32 1.1754944e-38, %v693
      %v695 = vsel %vm692, %v694, %v690
      %v696 = vmul.f32 1.0, %v695
      %v697 = vrcp.pop %v541
      %v698 = vmul.f32 %v541, %v697
      %v699 = vsub.f32 1.0, %v698
      %v700 = vmul.f32 %v697, %v699
      %v701 = vadd.f32 %v697, %v700
      %vm702 = vweird.f32 %v541
      %vm703 = vweird.f32 %v697
      %vm704 = vmor %vm702, %vm703
      %v705 = vsel %vm704, %v697, %v701
      %v706 = vand.u32 2147483647, %v541
      %vm707 = vcmp.eq.f32.partialorder %v706, 8.507059e+37
      %v708 = vand.u32 %v541, 2147483648
      %v709 = vor.u32 1.1754944e-38, %v708
      %v710 = vsel %vm707, %v709, %v705
      %v711 = vmul.f32 1.0, %v710
      %v712 = vrcp.pop %v542
      %v713 = vmul.f32 %v542, %v712
      %v714 = vsub.f32 1.0, %v713
      %v715 = vmul.f32 %v712, %v714
      %v716 = vadd.f32 %v712, %v715
      %vm717 = vweird.f32 %v542
      %vm718 = vweird.f32 %v712
      %vm719 = vmor %vm717, %vm718
      %v720 = vsel %vm719, %v712, %v716
      %v721 = vand.u32 2147483647, %v542
      %vm722 = vcmp.eq.f32.partialorder %v721, 8.507059e+37
      %v723 = vand.u32 %v542, 2147483648
      %v724 = vor.u32 1.1754944e-38, %v723
      %v725 = vsel %vm722, %v724, %v720
      %v726 = vmul.f32 1.0, %v725
      %v727 = vrcp.pop %v543
      %v728 = vmul.f32 %v543, %v727
      %v729 = vsub.f32 1.0, %v728
      %v730 = vmul.f32 %v727, %v729
      %v731 = vadd.f32 %v727, %v730
      %vm732 = vweird.f32 %v543
      %vm733 = vweird.f32 %v727
      %vm734 = vmor %vm732, %vm733
      %v735 = vsel %vm734, %v727, %v731
      %v736 = vand.u32 2147483647, %v543
      %vm737 = vcmp.eq.f32.partialorder %v736, 8.507059e+37
      %v738 = vand.u32 %v543, 2147483648
      %v739 = vor.u32 1.1754944e-38, %v738
      %v740 = vsel %vm737, %v739, %v735
      %v741 = vmul.f32 1.0, %v740
      %v742 = vrcp.pop %v544
      %v743 = vmul.f32 %v544, %v742
      %v744 = vsub.f32 1.0, %v743
      %v745 = vmul.f32 %v742, %v744
      %v746 = vadd.f32 %v742, %v745
      %vm747 = vweird.f32 %v544
      %vm748 = vweird.f32 %v742
      %vm749 = vmor %vm747, %vm748
      %v750 = vsel %vm749, %v742, %v746
      %v751 = vand.u32 2147483647, %v544
      %vm752 = vcmp.eq.f32.partialorder %v751, 8.507059e+37
      %v753 = vand.u32 %v544, 2147483648
      %v754 = vor.u32 1.1754944e-38, %v753
      %v755 = vsel %vm752, %v754, %v750
      %v756 = vmul.f32 1.0, %v755
      %v757 = vrcp.pop %v545
      %v758 = vmul.f32 %v545, %v757
      %v759 = vsub.f32 1.0, %v758
      %v760 = vmul.f32 %v757, %v759
      %v761 = vadd.f32 %v757, %v760
      %vm762 = vweird.f32 %v545
      %vm763 = vweird.f32 %v757
      %vm764 = vmor %vm762, %vm763
      %v765 = vsel %vm764, %v757, %v761
      %v766 = vand.u32 2147483647, %v545
      %vm767 = vcmp.eq.f32.partialorder %v766, 8.507059e+37
      %v768 = vand.u32 %v545, 2147483648
      %v769 = vor.u32 1.1754944e-38, %v768
      %v770 = vsel %vm767, %v769, %v765
      %v771 = vmul.f32 1.0, %v770
      %v772 = vrcp.pop %v546
      %v773 = vmul.f32 %v546, %v772
      %v774 = vsub.f32 1.0, %v773
      %v775 = vmul.f32 %v772, %v774
      %v776 = vadd.f32 %v772, %v775
      %vm777 = vweird.f32 %v546
      %vm778 = vweird.f32 %v772
      %vm779 = vmor %vm777, %vm778
      %v780 = vsel %vm779, %v772, %v776
      %v781 = vand.u32 2147483647, %v546
      %vm782 = vcmp.eq.f32.partialorder %v781, 8.507059e+37
      %v783 = vand.u32 %v546, 2147483648
      %v784 = vor.u32 1.1754944e-38, %v783
      %v785 = vsel %vm782, %v784, %v780
      %v786 = vmul.f32 1.0, %v785
      %vm787 = vcmask 7168
      %788 = vst.msk [vmem:[%s227] sm:$0xff] %vm787, %v561
      %789 = vst.msk [vmem:[%s227 + $0x8] sm:$0xff] %vm787, %v576
      %790 = vst.msk [vmem:[%s227 + $0x10] sm:$0xff] %vm787, %v591
      %791 = vst.msk [vmem:[%s227 + $0x18] sm:$0xff] %vm787, %v606
      %792 = vst.msk [vmem:[%s227 + $0x20] sm:$0xff] %vm787, %v621
      %793 = vst.msk [vmem:[%s227 + $0x28] sm:$0xff] %vm787, %v636
      %794 = vst.msk [vmem:[%s227 + $0x30] sm:$0xff] %vm787, %v651
      %795 = vst.msk [vmem:[%s227 + $0x38] sm:$0xff] %vm787, %v666
      %796 = vst.msk [vmem:[%s227 + $0x40] sm:$0xff] %vm787, %v681
      %797 = vst.msk [vmem:[%s227 + $0x48] sm:$0xff] %vm787, %v696
      %798 = vst.msk [vmem:[%s227 + $0x50] sm:$0xff] %vm787, %v711
      %799 = vst.msk [vmem:[%s227 + $0x58] sm:$0xff] %vm787, %v726
      %800 = vst.msk [vmem:[%s227 + $0x60] sm:$0xff] %vm787, %v741
      %801 = vst.msk [vmem:[%s227 + $0x68] sm:$0xff] %vm787, %v756
      %802 = vst.msk [vmem:[%s227 + $0x70] sm:$0xff] %vm787, %v771
      %803 = vst.msk [vmem:[%s227 + $0x78] sm:$0xff] %vm787, %v786
      %s804 = smul.u32 16, %s17
      %p805 = scmp.lt.s32.totalorder %s804, 31
      %s806 = scalar_select %p805, %s804, 31
      %s807 = smul.addr %s806, 8
      %s808 = scalar_lea.vmem %s5, %s807
      // Predicated region
      $region41: #{tpu_custom_call.1} parent=39 // pred_check
        %p809 = pneg %p145
      $region42: #{tpu_custom_call.1} parent=39 // pred_check_branch
        %811 = sbr.rel (%p809) target = $region44
      $region43: #{tpu_custom_call.1} parent=39 // pred_region
        %s812 = smul.u32 16, %s17
      $region44: #{tpu_custom_call.1} parent=39 // pred_fallthru
        _
    $region40: #{tpu_custom_call.1} parent=5 // pred_fallthru
      _
    %p813 = scmp.le.s32.totalorder 2, %s12
    // Predicated region
    $region45: #{tpu_custom_call.1} parent=5 // pred_check
      %p814 = pneg %p813
    $region46: #{tpu_custom_call.1} parent=5 // pred_check_branch
      %816 = sbr.rel (%p814) target = $region48
    $region47: #{tpu_custom_call.1} parent=5 // pred_region
      %s817 = ssub.s32 %s12, 2
      // Predicated region
      $region49: #{tpu_custom_call.1} parent=47 // pred_check
        %p818 = pneg %p151
      $region50: #{tpu_custom_call.1} parent=47 // pred_check_branch
        %820 = sbr.rel (%p818) target = $region52
      $region51: #{tpu_custom_call.1} parent=47 // pred_region
        %s821 = smul.u32 16, %s18
        %p822 = scmp.lt.s32.totalorder %s821, 31
        %s823 = scalar_select %p822, %s821, 31
        %s824 = smul.addr %s823, 8
        %s825 = scalar_lea.vmem %s5, %s824
      $region52: #{tpu_custom_call.1} parent=47 // pred_fallthru
        _
    $region48: #{tpu_custom_call.1} parent=5 // pred_fallthru
      _
  $region6: #{tpu_custom_call.1} parent=0 // loop_footer
    %s16 = sadd.s32 1, %s12
  $region7: #{tpu_custom_call.1} parent=0 // loop_footer_branch
    %11 = sbr.rel target = $region3
  $region8: #{tpu_custom_call.1} parent=0 // loop_exit
    _

</llo_original>
